<compile_context>
chip_gen: v7x
topology: tpu7x:2x2x1
jax: 0.10.0
libtpu: 0.0.40
codegen_flags: <defaults>
</compile_context>

<pallas_src>
import jax
import jax.numpy as jnp
from jax.experimental import pallas as pl
from jax.experimental.pallas import tpu as pltpu


def _round_up(n, m):
    return ((n + m - 1) // m) * m


def _pick_tile_rows(B, F, itemsize):
    row_bytes = max(1, F * itemsize)
    target = 4 << 20                      # ~4 MiB x block -> ~8 MiB double-buffered
    tb = target // row_bytes
    if tb >= 1024:
        tb = min(16384, tb // 1024 * 1024)
    else:
        tb = max(128, tb // 128 * 128)
    # For large B, aim for >= 4 grid steps (pipeline depth; shards the "parallel"
    # batch axis across both v7x TensorCores) while keeping blocks >= ~2 MiB so
    # v5e/v6e stay near their HBM-roofline plateau.
    while (B > tb and pl.cdiv(B, tb) < 4 and tb >= 2048
           and (tb // 2) * row_bytes >= (2 << 20)):
        tb = (tb // 2) // 1024 * 1024
    return tb


def _sigmoid_linear_kernel(x_ref, w_ref, b_ref, o_ref):
    # x_ref: (tb, F) input tile (native dtype), streamed
    # w_ref: (1, F) f32 weight row, resident across grid steps
    # b_ref: (1, 1) f32 bias in SMEM
    # o_ref: (tb//128, 128) f32 lane-dense output slab tile
    F = x_ref.shape[1]
    nr = o_ref.shape[0]
    bias = b_ref[0, 0]

    # Hoisted once per block: weight broadcast over a 128-row chunk, and the
    # boolean identity mask used to relayout chunk-row i -> lane i.
    w_b = jnp.broadcast_to(w_ref[...], (128, F)).astype(jnp.float32)
    sub = jax.lax.broadcasted_iota(jnp.int32, (128, 128), 0)
    lane = jax.lax.broadcasted_iota(jnp.int32, (128, 128), 1)
    eye = sub == lane

    group_nr = 8 if nr % 8 == 0 else nr      # output rows per group (one (8,128) vreg)
    n_groups = nr // group_nr

    def do_group(g, carry):
        o_row0 = pl.multiple_of(g * group_nr, group_nr)
        rows = []
        for c in range(group_nr):            # static unroll, <= 8
            r0 = pl.multiple_of(g * (group_nr * 128) + c * 128, 128)
            xc = x_ref[pl.ds(r0, 128), :]                        # (128, F) native dtype
            p = xc.astype(jnp.float32) * w_b                     # exact f32 products (VPU)
            s = jnp.sum(p, axis=-1, keepdims=True)               # (128, 1) exact row sums
            # row i -> lane i via select + sublane sum (lane-dense (1,128) row);
            # jnp.where (not multiply) so garbage boundary rows can't leak NaN.
            rows.append(jnp.sum(jnp.where(eye, s, 0.0), axis=0, keepdims=True))
        grp = jnp.concatenate(rows, axis=0)                      # (group_nr, 128)
        # ONE bias add + ONE sigmoid + ONE full-width aligned store per group.
        o_ref[pl.ds(o_row0, group_nr), :] = jax.nn.sigmoid(grp + bias)
        return carry

    if n_groups == 1:
        do_group(0, 0)
    else:
        jax.lax.fori_loop(0, n_groups, do_group, 0)


def model_forward(x, weight, bias):
    """Equivalent of torch.sigmoid(nn.Linear(F, 1)(x)).view(-1).

    x:      (B, F) float32/bfloat16
    weight: (1, F) float32   (nn.Linear weight layout)
    bias:   (1,)   float32
    returns (B,)   float32
    """
    B, F = x.shape
    itemsize = jnp.dtype(x.dtype).itemsize
    tb = _pick_tile_rows(B, F, itemsize)
    if B <= tb:
        # Single block: round up to full 128-lane rows (and to a multiple of 1024
        # above 1K rows so output groups stay full (8,128) vregs).  No x padding.
        tb = _round_up(B, 128) if B <= 1024 else _round_up(B, 1024)
    grid = pl.cdiv(B, tb)
    nr = tb // 128
    out_rows = pl.cdiv(B, 128)            # true slab rows; boundary blocks clipped

    w_row = weight.reshape(1, F).astype(jnp.float32)
    b_smem = bias.reshape(1, 1).astype(jnp.float32)

    # TODO(synk): tile the feature dim with an f32 accumulator for num_words so
    # large that a single (128, F) chunk no longer fits comfortably in VMEM.

    x_blk_bytes = tb * F * itemsize
    vmem_need = 2 * x_blk_bytes + 2 * nr * 128 * 4 + 2 * 128 * F * 4 + (4 << 20)

    out = pl.pallas_call(
        _sigmoid_linear_kernel,
        out_shape=jax.ShapeDtypeStruct((out_rows, 128), jnp.float32),
        grid=(grid,),
        in_specs=[
            pl.BlockSpec((tb, F), lambda i: (i, 0)),      # streamed x tiles
            pl.BlockSpec((1, F), lambda i: (0, 0)),       # resident weight row
            pl.BlockSpec(memory_space=pltpu.SMEM),        # bias scalar in SMEM
        ],
        out_specs=pl.BlockSpec((nr, 128), lambda i: (i, 0)),   # lane-dense slab
        compiler_params=pltpu.CompilerParams(
            dimension_semantics=("parallel",),
            vmem_limit_bytes=int(min(100 << 20, max(32 << 20, vmem_need))),
        ),
    )(x, w_row, b_smem)
    return out.reshape(-1)[:B]


if __name__ == "__main__":
    num_words = 127
    F = num_words + 1

    key = jax.random.PRNGKey(0)
    kx, kw, kb, kx2, kx3 = jax.random.split(key, 5)

    bound = 1.0 / jnp.sqrt(jnp.float32(F))
    weight = jax.random.uniform(kw, (1, F), minval=-bound, maxval=bound, dtype=jnp.float32)
    bias = jax.random.uniform(kb, (1,), minval=-bound, maxval=bound, dtype=jnp.float32)

    def reference(xv):
        z = jnp.dot(xv, weight.T, precision=jax.lax.Precision.HIGHEST) + bias
        return jax.nn.sigmoid(z).reshape(-1)

    # Small shape consistent with the module: batch=8, features=num_words+1=128.
    B = 8
    x = jax.random.normal(kx, (B, F), dtype=jnp.float32)
    out = model_forward(x, weight, bias)
    jax.block_until_ready(out)
    assert out.shape == (B,)
    assert jnp.allclose(out, reference(x), atol=1e-5, rtol=1e-5)

    # Ragged batch, single tile: exercises masked boundary rows with no x padding.
    B2 = 5000
    x2 = jax.random.normal(kx2, (B2, F), dtype=jnp.float32)
    out2 = model_forward(x2, weight, bias)
    jax.block_until_ready(out2)
    assert out2.shape == (B2,)
    assert jnp.allclose(out2, reference(x2), atol=1e-5, rtol=1e-5)

    # Ragged batch, multi-tile pipelined path with a partial boundary block.
    B3 = 20000
    x3 = jax.random.normal(kx3, (B3, F), dtype=jnp.float32)
    out3 = model_forward(x3, weight, bias)
    jax.block_until_ready(out3)
    assert out3.shape == (B3,)
    assert jnp.allclose(out3, reference(x3), atol=1e-5, rtol=1e-5)

    print("KERNEL_OK")
</pallas_src>

<mosaic_0001>
module attributes {stable_mosaic.version = 11 : i64} {
  func.func @_sigmoid_linear_kernel(%arg0: i32, %arg1: memref<128x128xf32, #tpu.memory_space<vmem>>, %arg2: memref<1x128xf32, #tpu.memory_space<vmem>>, %arg3: memref<1x1xf32, #tpu.memory_space<smem>>, %arg4: memref<1x128xf32, #tpu.memory_space<vmem>>) attributes {dimension_semantics = [#tpu.dimension_semantics<parallel>], iteration_bounds = array<i64: 1>, scalar_prefetch = 0 : i64, scratch_operands = 0 : i64, tpu.core_type = #tpu.core_type<tc>, window_params = [{transform_indices = @transform_0, window_bounds = array<i64: 128, 128>}, {pipeline_mode = #tpu.pipeline_mode<synchronous>, transform_indices = @transform_1, window_bounds = array<i64: 1, 128>}, {transform_indices = @transform_2, window_bounds = array<i64: 1, 1>}, {transform_indices = @transform_3, window_bounds = array<i64: 1, 128>}]} {
    %c0 = arith.constant 0 : index
    %c0_0 = arith.constant 0 : index
    %0 = memref.load %arg3[%c0, %c0_0] : memref<1x1xf32, #tpu.memory_space<smem>>
    %c0_1 = arith.constant 0 : index
    %c0_2 = arith.constant 0 : index
    %1 = vector.load %arg2[%c0_1, %c0_2] : memref<1x128xf32, #tpu.memory_space<vmem>>, vector<1x128xf32>
    %2 = vector.shape_cast %1 : vector<1x128xf32> to vector<1x128xf32>
    %3 = vector.broadcast %2 : vector<1x128xf32> to vector<128x128xf32>
    %4 = tpu.iota {dimensions = array<i32: 0>} : vector<128x128xi32>
    %5 = tpu.iota {dimensions = array<i32: 1>} : vector<128x128xi32>
    %6 = arith.cmpi eq, %4, %5 : vector<128x128xi32>
    %c0_i32 = arith.constant 0 : i32
    %7 = tpu.assume_multiple %c0_i32, 1 : i32
    %c0_i32_3 = arith.constant 0 : i32
    %8 = tpu.assume_multiple %c0_i32_3, 128 : i32
    %9 = arith.index_cast %8 : i32 to index
    %c0_4 = arith.constant 0 : index
    %10 = vector.load %arg1[%9, %c0_4] : memref<128x128xf32, #tpu.memory_space<vmem>>, vector<128x128xf32>
    %11 = arith.mulf %10, %3 : vector<128x128xf32>
    %cst = arith.constant dense<0.000000e+00> : vector<128xf32>
    %12 = vector.multi_reduction <add>, %11, %cst [1] : vector<128x128xf32> to vector<128xf32>
    %13 = vector.shape_cast %12 : vector<128xf32> to vector<128x1xf32>
    %cst_5 = arith.constant 0.000000e+00 : f32
    %14 = vector.shape_cast %13 : vector<128x1xf32> to vector<128x1xf32>
    %15 = vector.broadcast %14 : vector<128x1xf32> to vector<128x128xf32>
    %16 = vector.broadcast %cst_5 : f32 to vector<128x128xf32>
    %17 = arith.select %6, %15, %16 : vector<128x128xi1>, vector<128x128xf32>
    %cst_6 = arith.constant dense<0.000000e+00> : vector<128xf32>
    %18 = vector.multi_reduction <add>, %17, %cst_6 [0] : vector<128x128xf32> to vector<128xf32>
    %19 = vector.shape_cast %18 : vector<128xf32> to vector<1x128xf32>
    %20 = vector.broadcast %0 : f32 to vector<1x128xf32>
    %21 = arith.addf %19, %20 : vector<1x128xf32>
    %22 = arith.negf %21 : vector<1x128xf32>
    %23 = math.exp %22 : vector<1x128xf32>
    %cst_7 = arith.constant 1.000000e+00 : f32
    %24 = vector.broadcast %cst_7 : f32 to vector<1x128xf32>
    %25 = arith.addf %24, %23 : vector<1x128xf32>
    %26 = arith.divf %24, %25 : vector<1x128xf32>
    %27 = arith.index_cast %7 : i32 to index
    %c0_8 = arith.constant 0 : index
    %28 = vector.load %arg4[%27, %c0_8] : memref<1x128xf32, #tpu.memory_space<vmem>>, vector<1x128xf32>
    tpu.vector_store %arg4[%27, %c0_8], %26 {strides = array<i32>} : memref<1x128xf32, #tpu.memory_space<vmem>>, vector<1x128xf32>,
    return
  }
  func.func @transform_0(%arg0: i32) -> (i32, i32) {
    %c0_i32 = arith.constant 0 : i32
    %c0_i32_0 = arith.constant 0 : i32
    return %arg0, %c0_i32 : i32, i32
  }
  func.func @transform_1(%arg0: i32) -> (i32, i32) {
    %c0_i32 = arith.constant 0 : i32
    %c0_i32_0 = arith.constant 0 : i32
    %c0_i32_1 = arith.constant 0 : i32
    return %c0_i32, %c0_i32_0 : i32, i32
  }
  func.func @transform_2(%arg0: i32) -> (i32, i32) {
    %c0_i32 = arith.constant 0 : i32
    %c0_i32_0 = arith.constant 0 : i32
    %c0_i32_1 = arith.constant 0 : i32
    return %c0_i32, %c0_i32_0 : i32, i32
  }
  func.func @transform_3(%arg0: i32) -> (i32, i32) {
    %c0_i32 = arith.constant 0 : i32
    %c0_i32_0 = arith.constant 0 : i32
    return %arg0, %c0_i32 : i32, i32
  }
}

</mosaic_0001>

<llo_original>
// kernel: tpu_custom_call.1
$region0: #{tpu_custom_call.1}
  #allocation0 [shape = 'u32[]', space=smem, size = 0x4, offset = 0x4, fixed_abs, tag = 'smem constant byte address 0x4 - core index']
  #allocation1 [shape = 'u32[144,128]{1,0:T(1,128)}', space=vmem, size = 0x12000, scoped, tag = 'internal scratch']
  #allocation2 [shape = 'f32[1,1]{1,0:T(1,128)S(6)}', space=smem, size = 0x200, scoped, tag = 'scoped memory for tpu_custom_call.1']
  %s0 = inlined_call_operand.hbm [shape: f32[8,128], index: 0, kind: input, shape index: {}]
  %s1 = inlined_call_operand.vmem [shape: f32[1,128], index: 1, kind: input, shape index: {}]
  %s2 = inlined_call_operand.<no memory space> [shape: f32[1,1], index: 2, kind: input, shape index: {}]
  %s3 = inlined_call_operand.hbm [shape: f32[1,128], index: 3, kind: output, shape index: {}]
  %s4 = sld [smem:[#allocation0]]
  $region26: #{tpu_custom_call.1} parent=0
    _
  %s6 = ssub.s32 1, %s4
  %s7 = scalar_select 0, %s6, %s4
  %8 = sst [smem:[#allocation2]] %s2
  $region1: #{tpu_custom_call.1} parent=0
    #allocation3 [shape = 'u8[65536]{0}', space=vmem, size = 0x10000, scoped, tag = 'input window, operand 0, single buffered']
    #allocation4 [shape = 's32[1]{0}', space=sflag, size = 0x4, scoped, tag = 'scoped memory for tpu_custom_call.1']
    #allocation5 [shape = 's32[1]{0}', space=sflag, size = 0x4, scoped, tag = 'scoped memory for tpu_custom_call.1']
    #allocation6 [shape = 'u8[512]{0}', space=vmem, size = 0x400, scoped, tag = 'output window, operand 0, single buffered']
    %9 = vsyncpa [#allocation4], 0
    %10 = vsyncpa [#allocation5], 0
    // Predicated region
    $region2: #{tpu_custom_call.1} parent=1 // pred_check
      _
    $region3: #{tpu_custom_call.1} parent=1 // pred_check_branch
      %12 = sbr.rel (0) target = $region5
    $region4: #{tpu_custom_call.1} parent=1 // pred_region
      %s14 = ssub.s32 2048, 128
      %15 = vsyncadd [#allocation4], %s14
      %s16 = sshll.u32 [#allocation3], 4
      %s17 = int_to_ptr.vmem [resolvable:$true] %s16
      %22 = dma.hbm_to_vmem [thread:$0]  %s0, 128, %s17, [#allocation4], 128, 128, 8
    $region5: #{tpu_custom_call.1} parent=1 // pred_fallthru
      _
    // Predicated region
    $region6: #{tpu_custom_call.1} parent=1 // pred_check
      _
    $region7: #{tpu_custom_call.1} parent=1 // pred_check_branch
      %24 = sbr.rel (0) target = $region9
    $region8: #{tpu_custom_call.1} parent=1 // pred_region
      _
    $region9: #{tpu_custom_call.1} parent=1 // pred_fallthru
      _
    // Predicated region
    $region10: #{tpu_custom_call.1} parent=1 // pred_check
      _
    $region11: #{tpu_custom_call.1} parent=1 // pred_check_branch
      %26 = sbr.rel (0) target = $region13
    $region12: #{tpu_custom_call.1} parent=1 // pred_region
      _
    $region13: #{tpu_custom_call.1} parent=1 // pred_fallthru
      _
    // Predicated region
    $region14: #{tpu_custom_call.1} parent=1 // pred_check
      _
    $region15: #{tpu_custom_call.1} parent=1 // pred_check_branch
      %28 = sbr.rel (0) target = $region17
    $region16: #{tpu_custom_call.1} parent=1 // pred_region
      %29 = dma.done [#allocation4], 2048
    $region17: #{tpu_custom_call.1} parent=1 // pred_fallthru
      _
    %s30 = sld [smem:[#allocation2]]
    %v31 = vld [vmem:[%s1] sm:$0x1]
    %v33 = vlaneseq
    %v34 = vshrl.u32 %v33, 7
    %v35 = vsub.s32 0, %v34
    %v36 = vrot.slane %v31, %v35
    %v38 = vlaneseq
    %v39 = vshrl.u32 %v38, 7
    %v40 = vadd.s32 %v39, 8
    %v41 = vadd.s32 %v39, 16
    %v42 = vadd.s32 %v39, 24
    %v43 = vadd.s32 %v39, 32
    %v44 = vadd.s32 %v39, 40
    %v45 = vadd.s32 %v39, 48
    %v46 = vadd.s32 %v39, 56
    %v47 = vadd.s32 %v39, 64
    %v48 = vadd.s32 %v39, 72
    %v49 = vadd.s32 %v39, 80
    %v50 = vadd.s32 %v39, 88
    %v51 = vadd.s32 %v39, 96
    %v52 = vadd.s32 %v39, 104
    %v53 = vadd.s32 %v39, 112
    %v54 = vadd.s32 %v39, 120
    %v55 = vlaneseq
    %v56 = vand.u32 %v55, 127
    %vm57 = vcmp.eq.s32.totalorder %v39, %v56
    %vm58 = vcmp.eq.s32.totalorder %v40, %v56
    %vm59 = vcmp.eq.s32.totalorder %v41, %v56
    %vm60 = vcmp.eq.s32.totalorder %v42, %v56
    %vm61 = vcmp.eq.s32.totalorder %v43, %v56
    %vm62 = vcmp.eq.s32.totalorder %v44, %v56
    %vm63 = vcmp.eq.s32.totalorder %v45, %v56
    %vm64 = vcmp.eq.s32.totalorder %v46, %v56
    %vm65 = vcmp.eq.s32.totalorder %v47, %v56
    %vm66 = vcmp.eq.s32.totalorder %v48, %v56
    %vm67 = vcmp.eq.s32.totalorder %v49, %v56
    %vm68 = vcmp.eq.s32.totalorder %v50, %v56
    %vm69 = vcmp.eq.s32.totalorder %v51, %v56
    %vm70 = vcmp.eq.s32.totalorder %v52, %v56
    %vm71 = vcmp.eq.s32.totalorder %v53, %v56
    %vm72 = vcmp.eq.s32.totalorder %v54, %v56
    %v73 = vld [vmem:[#allocation3] sm:$0xff]
    %v74 = vld [vmem:[#allocation3 + $0x8] sm:$0xff]
    %v75 = vld [vmem:[#allocation3 + $0x10] sm:$0xff]
    %v76 = vld [vmem:[#allocation3 + $0x18] sm:$0xff]
    %v77 = vld [vmem:[#allocation3 + $0x20] sm:$0xff]
    %v78 = vld [vmem:[#allocation3 + $0x28] sm:$0xff]
    %v79 = vld [vmem:[#allocation3 + $0x30] sm:$0xff]
    %v80 = vld [vmem:[#allocation3 + $0x38] sm:$0xff]
    %v81 = vld [vmem:[#allocation3 + $0x40] sm:$0xff]
    %v82 = vld [vmem:[#allocation3 + $0x48] sm:$0xff]
    %v83 = vld [vmem:[#allocation3 + $0x50] sm:$0xff]
    %v84 = vld [vmem:[#allocation3 + $0x58] sm:$0xff]
    %v85 = vld [vmem:[#allocation3 + $0x60] sm:$0xff]
    %v86 = vld [vmem:[#allocation3 + $0x68] sm:$0xff]
    %v87 = vld [vmem:[#allocation3 + $0x70] sm:$0xff]
    %v88 = vld [vmem:[#allocation3 + $0x78] sm:$0xff]
    %v89 = vmul.f32 %v73, %v36
    %v90 = vmul.f32 %v74, %v36
    %v91 = vmul.f32 %v75, %v36
    %v92 = vmul.f32 %v76, %v36
    %v93 = vmul.f32 %v77, %v36
    %v94 = vmul.f32 %v78, %v36
    %v95 = vmul.f32 %v79, %v36
    %v96 = vmul.f32 %v80, %v36
    %v97 = vmul.f32 %v81, %v36
    %v98 = vmul.f32 %v82, %v36
    %v99 = vmul.f32 %v83, %v36
    %v100 = vmul.f32 %v84, %v36
    %v101 = vmul.f32 %v85, %v36
    %v102 = vmul.f32 %v86, %v36
    %v103 = vmul.f32 %v87, %v36
    %v104 = vmul.f32 %v88, %v36
    %105 = vadd.xlane.f32.xlu0 %v89
    %v106 = vpop.xlane.xlu0 %105
    %107 = vadd.xlane.f32.xlu0 %v90
    %v108 = vpop.xlane.xlu0 %107
    %109 = vadd.xlane.f32.xlu0 %v91
    %v110 = vpop.xlane.xlu0 %109
    %111 = vadd.xlane.f32.xlu0 %v92
    %v112 = vpop.xlane.xlu0 %111
    %113 = vadd.xlane.f32.xlu0 %v93
    %v114 = vpop.xlane.xlu0 %113
    %115 = vadd.xlane.f32.xlu0 %v94
    %v116 = vpop.xlane.xlu0 %115
    %117 = vadd.xlane.f32.xlu0 %v95
    %v118 = vpop.xlane.xlu0 %117
    %119 = vadd.xlane.f32.xlu0 %v96
    %v120 = vpop.xlane.xlu0 %119
    %121 = vadd.xlane.f32.xlu0 %v97
    %v122 = vpop.xlane.xlu0 %121
    %123 = vadd.xlane.f32.xlu0 %v98
    %v124 = vpop.xlane.xlu0 %123
    %125 = vadd.xlane.f32.xlu0 %v99
    %v126 = vpop.xlane.xlu0 %125
    %127 = vadd.xlane.f32.xlu0 %v100
    %v128 = vpop.xlane.xlu0 %127
    %129 = vadd.xlane.f32.xlu0 %v101
    %v130 = vpop.xlane.xlu0 %129
    %131 = vadd.xlane.f32.xlu0 %v102
    %v132 = vpop.xlane.xlu0 %131
    %133 = vadd.xlane.f32.xlu0 %v103
    %v134 = vpop.xlane.xlu0 %133
    %135 = vadd.xlane.f32.xlu0 %v104
    %v136 = vpop.xlane.xlu0 %135
    %v137 = vsel %vm57, %v106, 0.0
    %v138 = vsel %vm58, %v108, 0.0
    %v139 = vsel %vm59, %v110, 0.0
    %v140 = vsel %vm60, %v112, 0.0
    %v141 = vsel %vm61, %v114, 0.0
    %v142 = vsel %vm62, %v116, 0.0
    %v143 = vsel %vm63, %v118, 0.0
    %v144 = vsel %vm64, %v120, 0.0
    %v145 = vsel %vm65, %v122, 0.0
    %v146 = vsel %vm66, %v124, 0.0
    %v147 = vsel %vm67, %v126, 0.0
    %v148 = vsel %vm68, %v128, 0.0
    %v149 = vsel %vm69, %v130, 0.0
    %v150 = vsel %vm70, %v132, 0.0
    %v151 = vsel %vm71, %v134, 0.0
    %v152 = vsel %vm72, %v136, 0.0
    %v153 = vadd.f32 %v137, %v138
    %v154 = vadd.f32 %v153, %v139
    %v155 = vadd.f32 %v154, %v140
    %v156 = vadd.f32 %v155, %v141
    %v157 = vadd.f32 %v156, %v142
    %v158 = vadd.f32 %v157, %v143
    %v159 = vadd.f32 %v158, %v144
    %v160 = vadd.f32 %v159, %v145
    %v161 = vadd.f32 %v160, %v146
    %v162 = vadd.f32 %v161, %v147
    %v163 = vadd.f32 %v162, %v148
    %v164 = vadd.f32 %v163, %v149
    %v165 = vadd.f32 %v164, %v150
    %v166 = vadd.f32 %v165, %v151
    %v167 = vadd.f32 %v166, %v152
    %v168 = vrot.slane %v167, 4
    %v169 = vadd.f32 %v167, %v168
    %v170 = vrot.slane %v169, 2
    %v171 = vadd.f32 %v169, %v170
    %v172 = vrot.slane %v171, 1
    %v173 = vadd.f32 %v171, %v172
    %v174 = vstv %s30
    %v175 = vadd.f32 %v173, %v174
    %v176 = vxor.u32 %v175, 2147483648
    %v177 = vmul.f32 %v176, 1.442695
    %v178 = vpow.pop %v177
    %v179 = vadd.f32 %v178, 1.0
    %v180 = vrcp.pop %v179
    %v181 = vmul.f32 1.0, %v180
    %182 = vst [vmem:[#allocation6] sm:$0x1] %v181
    // Predicated region
    $region18: #{tpu_custom_call.1} parent=1 // pred_check
      _
    $region19: #{tpu_custom_call.1} parent=1 // pred_check_branch
      %184 = sbr.rel (0) target = $region21
    $region20: #{tpu_custom_call.1} parent=1 // pred_region
      %s186 = ssub.s32 16, 16
      %187 = vsyncadd [#allocation5], %s186
      %s189 = sshll.u32 [#allocation6], 4
      %s190 = int_to_ptr.vmem [resolvable:$true] %s189
      %192 = dma.vmem_to_hbm [thread:$0]  %s190, 16, %s3, [#allocation5]
    $region21: #{tpu_custom_call.1} parent=1 // pred_fallthru
      _
    // Predicated region
    $region22: #{tpu_custom_call.1} parent=1 // pred_check
      _
    $region23: #{tpu_custom_call.1} parent=1 // pred_check_branch
      %194 = sbr.rel (0) target = $region25
    $region24: #{tpu_custom_call.1} parent=1 // pred_region
      %195 = dma.done [#allocation5], 16
    $region25: #{tpu_custom_call.1} parent=1 // pred_fallthru
      _
    %196 = vsyncpa [#allocation4], 1
    %197 = vsyncpa [#allocation5], 1

</llo_original>
